<compile_context>
chip_gen: v5e
topology: v5e:2x2
jax: 0.10.0
libtpu: 0.0.40
codegen_flags: <defaults>
</compile_context>

<pallas_src>
import jax
import jax.numpy as jnp
from jax.experimental import pallas as pl
from jax.experimental.pallas import tpu as pltpu


_VMEM_BUDGET_BYTES = 30 * 1024 * 1024   # conservative block working-set budget
_VMEM_LIMIT_BYTES = 48 * 1024 * 1024    # explicit scoped-VMEM limit (< v7x 64 MiB)


def _dft_tables(h, w, dtype):
    """cos/sin DFT tables; stage-A tables column-reduced by rfft symmetry."""
    kh = jnp.arange(h, dtype=jnp.float32)
    ang_h = 2.0 * jnp.pi * jnp.outer(kh, kh) / h
    ch, sh = jnp.cos(ang_h), jnp.sin(ang_h)            # symmetric (H, H)

    kw = jnp.arange(w, dtype=jnp.float32)
    ang_w = 2.0 * jnp.pi * jnp.outer(kw, kw) / w
    cw, sw = jnp.cos(ang_w), jnp.sin(ang_w)            # symmetric (W, W)

    wk_logical = w // 2 + 1 if w % 2 == 0 else (w + 1) // 2
    wk = ((wk_logical + 7) // 8) * 8                   # sublane-friendly pad
    if wk < w:
        # rfft path: |F[k, W-l]| == |F[(H-k)%H, l]|, so keep columns 0..wk-1
        # and weight the mirrored ones by 2.  Weights are exact powers of two
        # -> folded into the tables with no precision loss and no runtime ops.
        wts = jnp.full((wk_logical,), 2.0, jnp.float32)
        wts = wts.at[0].set(1.0)                       # DC
        if w % 2 == 0:
            wts = wts.at[wk_logical - 1].set(1.0)      # Nyquist
        cw = cw[:, :wk_logical] * wts[None, :]
        sw = sw[:, :wk_logical] * wts[None, :]
        pad = wk - wk_logical
        if pad:                                        # zero cols -> |F| == 0
            cw = jnp.pad(cw, ((0, 0), (0, pad)))
            sw = jnp.pad(sw, ((0, 0), (0, pad)))
    else:
        wk = w                                         # small W: full spectrum

    return cw.astype(dtype), sw.astype(dtype), ch.astype(dtype), sh.astype(dtype), wk


def _per_slice_bytes(h, w, wk, in_bytes):
    """Conservative live-set bytes per (H, W) slice inside one grid step."""
    e = h * w
    ek = h * wk
    inputs = 2 * 2 * in_bytes * e        # x, y blocks, double-buffered pipeline
    diff = (4 + 2) * e                   # f32 diff + bf16 matmul copy
    stage_a = (8 + 8 + 4) * ek           # p,q f32 + f32 transposes + bf16 copies
    stage_b = (16 + 8 + 4) * ek          # 4 matmul outs + re/im + |.| (f32)
    return inputs + diff + stage_a + stage_b


def _pick_tb(n_slices, h, w, wk, in_bytes):
    per_slice = _per_slice_bytes(h, w, wk, in_bytes)
    tb = max(1, _VMEM_BUDGET_BYTES // per_slice)
    if n_slices > 1:
        # Keep >= 2 blocks so the "parallel" grid axis gives both v7x
        # TensorCores work (harmless on single-TC v5e/v6e).
        tb = min(tb, -(-n_slices // 2))
    return max(1, min(tb, n_slices))


def _make_kernel(tb, h, w, wk, cdtype):
    def kernel(x_ref, y_ref, cw_ref, sw_ref, ch_ref, sh_ref, out_ref):
        # Difference in f32 (elementwise math stays f32; only MXU operands
        # are cast to bf16).
        d = x_ref[...].astype(jnp.float32) - y_ref[...].astype(jnp.float32)
        d2 = d.astype(cdtype).reshape(tb * h, w)

        # Stage A (contract W): row-stacked matmuls, MXU M = tb*H.
        p = jnp.dot(d2, cw_ref[...], preferred_element_type=jnp.float32)
        q = jnp.dot(d2, sw_ref[...], preferred_element_type=jnp.float32)

        # Stage B (contract H): transpose once, row-stack over (tb, wk) so the
        # MXU sees M = tb*wk (instead of per-batch M = H).  Tables are
        # symmetric, so no transpose of the tables is needed, and the final
        # sum(|.|) is layout-invariant, so we never transpose back.
        p_t = jnp.swapaxes(p.reshape(tb, h, wk), 1, 2).reshape(tb * wk, h)
        q_t = jnp.swapaxes(q.reshape(tb, h, wk), 1, 2).reshape(tb * wk, h)
        p_t = p_t.astype(cdtype)
        q_t = q_t.astype(cdtype)

        ch = ch_ref[...]
        sh = sh_ref[...]
        # Standard 4-matmul complex product (avoids Karatsuba bf16 cancellation).
        re = (jnp.dot(p_t, ch, preferred_element_type=jnp.float32)
              - jnp.dot(q_t, sh, preferred_element_type=jnp.float32))
        im = (jnp.dot(q_t, ch, preferred_element_type=jnp.float32)
              + jnp.dot(p_t, sh, preferred_element_type=jnp.float32))

        out_ref[...] = jnp.sum(jnp.sqrt(re * re + im * im)).reshape(1, 1, 1)

    return kernel


def fft_loss(x, y, *, matmul_dtype=jnp.bfloat16):
    """x, y: (B, C, H, W) real arrays. Returns scalar f32 mean |fft2(x)-fft2(y)|."""
    B, C, H, W = x.shape
    n_slices = B * C
    xs = x.reshape(n_slices, H, W)      # original dtype: no extra HBM traffic
    ys = y.reshape(n_slices, H, W)

    cw, sw, ch, sh, wk = _dft_tables(H, W, matmul_dtype)

    tb = _pick_tb(n_slices, H, W, wk, x.dtype.itemsize)
    n_blocks = -(-n_slices // tb)
    pad = n_blocks * tb - n_slices
    if pad:
        # zero-padded slices contribute |fft2(0)| == 0 to the sum
        xs = jnp.pad(xs, ((0, pad), (0, 0), (0, 0)))
        ys = jnp.pad(ys, ((0, pad), (0, 0), (0, 0)))

    kernel = _make_kernel(tb, H, W, wk, matmul_dtype)

    partials = pl.pallas_call(
        kernel,
        out_shape=jax.ShapeDtypeStruct((n_blocks, 1, 1), jnp.float32),
        grid_spec=pltpu.PrefetchScalarGridSpec(
            num_scalar_prefetch=0,
            grid=(n_blocks,),
            in_specs=[
                pl.BlockSpec((tb, H, W), lambda i: (i, 0, 0)),   # x block
                pl.BlockSpec((tb, H, W), lambda i: (i, 0, 0)),   # y block
                pl.BlockSpec((W, wk), lambda i: (0, 0)),          # C_W (weighted)
                pl.BlockSpec((W, wk), lambda i: (0, 0)),          # S_W (weighted)
                pl.BlockSpec((H, H), lambda i: (0, 0)),           # C_H
                pl.BlockSpec((H, H), lambda i: (0, 0)),           # S_H
            ],
            out_specs=pl.BlockSpec((1, 1, 1), lambda i: (i, 0, 0)),
        ),
        compiler_params=pltpu.CompilerParams(
            # per-block partial sums -> safe to shard across v7x's two TCs
            dimension_semantics=("parallel",),
            vmem_limit_bytes=_VMEM_LIMIT_BYTES,
        ),
    )(xs, ys, cw, sw, ch, sh)

    return jnp.sum(partials) / jnp.float32(B * C * H * W)


if __name__ == "__main__":
    key = jax.random.PRNGKey(0)
    k1, k2, k3, k4 = jax.random.split(key, 4)

    # Primary check: module-consistent small shape (full-spectrum path).
    B, C, H, W = 2, 4, 16, 16
    x = jax.random.normal(k1, (B, C, H, W), dtype=jnp.float32)
    y = jax.random.normal(k2, (B, C, H, W), dtype=jnp.float32)
    loss = jax.jit(fft_loss)(x, y)
    jax.block_until_ready(loss)
    ref = jnp.mean(jnp.abs(jnp.fft.fft2(x) - jnp.fft.fft2(y)))
    assert jnp.allclose(loss, ref, rtol=2e-2, atol=1e-3), (loss, ref)

    # Secondary check: non-square shape exercising the rfft (column-reduced,
    # weight-folded) path and multi-slice blocks.
    x2 = jax.random.normal(k3, (2, 3, 32, 48), dtype=jnp.float32)
    y2 = jax.random.normal(k4, (2, 3, 32, 48), dtype=jnp.float32)
    loss2 = jax.jit(fft_loss)(x2, y2)
    jax.block_until_ready(loss2)
    ref2 = jnp.mean(jnp.abs(jnp.fft.fft2(x2) - jnp.fft.fft2(y2)))
    assert jnp.allclose(loss2, ref2, rtol=2e-2, atol=1e-3), (loss2, ref2)

    print("KERNEL_OK")
</pallas_src>

<mosaic_0001>
module attributes {stable_mosaic.version = 11 : i64} {
  func.func @kernel(%arg0: i32, %arg1: memref<4x16x16xf32, #tpu.memory_space<vmem>>, %arg2: memref<4x16x16xf32, #tpu.memory_space<vmem>>, %arg3: memref<16x16xbf16, #tpu.memory_space<vmem>>, %arg4: memref<16x16xbf16, #tpu.memory_space<vmem>>, %arg5: memref<16x16xbf16, #tpu.memory_space<vmem>>, %arg6: memref<16x16xbf16, #tpu.memory_space<vmem>>, %arg7: memref<1x1x1xf32, #tpu.memory_space<vmem>>) attributes {dimension_semantics = [#tpu.dimension_semantics<parallel>], iteration_bounds = array<i64: 2>, scalar_prefetch = 0 : i64, scratch_operands = 0 : i64, tpu.core_type = #tpu.core_type<tc>, window_params = [{transform_indices = @transform_0, window_bounds = array<i64: 4, 16, 16>}, {transform_indices = @transform_1, window_bounds = array<i64: 4, 16, 16>}, {pipeline_mode = #tpu.pipeline_mode<synchronous>, transform_indices = @transform_2, window_bounds = array<i64: 16, 16>}, {pipeline_mode = #tpu.pipeline_mode<synchronous>, transform_indices = @transform_3, window_bounds = array<i64: 16, 16>}, {pipeline_mode = #tpu.pipeline_mode<synchronous>, transform_indices = @transform_4, window_bounds = array<i64: 16, 16>}, {pipeline_mode = #tpu.pipeline_mode<synchronous>, transform_indices = @transform_5, window_bounds = array<i64: 16, 16>}, {transform_indices = @transform_6, window_bounds = array<i64: 1, 1, 1>}]} {
    %c0 = arith.constant 0 : index
    %c0_0 = arith.constant 0 : index
    %c0_1 = arith.constant 0 : index
    %0 = vector.load %arg1[%c0, %c0_0, %c0_1] : memref<4x16x16xf32, #tpu.memory_space<vmem>>, vector<4x16x16xf32>
    %c0_2 = arith.constant 0 : index
    %c0_3 = arith.constant 0 : index
    %c0_4 = arith.constant 0 : index
    %1 = vector.load %arg2[%c0_2, %c0_3, %c0_4] : memref<4x16x16xf32, #tpu.memory_space<vmem>>, vector<4x16x16xf32>
    %2 = arith.subf %0, %1 : vector<4x16x16xf32>
    %3 = arith.truncf %2 : vector<4x16x16xf32> to vector<4x16x16xbf16>
    %4 = vector.shape_cast %3 : vector<4x16x16xbf16> to vector<64x16xbf16>
    %c0_5 = arith.constant 0 : index
    %c0_6 = arith.constant 0 : index
    %5 = vector.load %arg3[%c0_5, %c0_6] : memref<16x16xbf16, #tpu.memory_space<vmem>>, vector<16x16xbf16>
    %cst = arith.constant dense<0.000000e+00> : vector<64x16xf32>
    %6 = tpu.matmul %4, %5, %cst {dimension_numbers = #tpu.dot_dimension_numbers<[1], [0], [0], [1], [0, 0, 1, 1], [], []>} : vector<64x16xbf16>, vector<16x16xbf16>, vector<64x16xf32> -> vector<64x16xf32>
    %c0_7 = arith.constant 0 : index
    %c0_8 = arith.constant 0 : index
    %7 = vector.load %arg4[%c0_7, %c0_8] : memref<16x16xbf16, #tpu.memory_space<vmem>>, vector<16x16xbf16>
    %cst_9 = arith.constant dense<0.000000e+00> : vector<64x16xf32>
    %8 = tpu.matmul %4, %7, %cst_9 {dimension_numbers = #tpu.dot_dimension_numbers<[1], [0], [0], [1], [0, 0, 1, 1], [], []>} : vector<64x16xbf16>, vector<16x16xbf16>, vector<64x16xf32> -> vector<64x16xf32>
    %9 = vector.shape_cast %6 : vector<64x16xf32> to vector<4x16x16xf32>
    %10 = tpu.transpose %9, [0, 2, 1] : vector<4x16x16xf32> -> vector<4x16x16xf32>
    %11 = vector.shape_cast %10 : vector<4x16x16xf32> to vector<64x16xf32>
    %12 = vector.shape_cast %8 : vector<64x16xf32> to vector<4x16x16xf32>
    %13 = tpu.transpose %12, [0, 2, 1] : vector<4x16x16xf32> -> vector<4x16x16xf32>
    %14 = vector.shape_cast %13 : vector<4x16x16xf32> to vector<64x16xf32>
    %15 = arith.truncf %11 : vector<64x16xf32> to vector<64x16xbf16>
    %16 = arith.truncf %14 : vector<64x16xf32> to vector<64x16xbf16>
    %c0_10 = arith.constant 0 : index
    %c0_11 = arith.constant 0 : index
    %17 = vector.load %arg5[%c0_10, %c0_11] : memref<16x16xbf16, #tpu.memory_space<vmem>>, vector<16x16xbf16>
    %c0_12 = arith.constant 0 : index
    %c0_13 = arith.constant 0 : index
    %18 = vector.load %arg6[%c0_12, %c0_13] : memref<16x16xbf16, #tpu.memory_space<vmem>>, vector<16x16xbf16>
    %cst_14 = arith.constant dense<0.000000e+00> : vector<64x16xf32>
    %19 = tpu.matmul %15, %17, %cst_14 {dimension_numbers = #tpu.dot_dimension_numbers<[1], [0], [0], [1], [0, 0, 1, 1], [], []>} : vector<64x16xbf16>, vector<16x16xbf16>, vector<64x16xf32> -> vector<64x16xf32>
    %cst_15 = arith.constant dense<0.000000e+00> : vector<64x16xf32>
    %20 = tpu.matmul %16, %18, %cst_15 {dimension_numbers = #tpu.dot_dimension_numbers<[1], [0], [0], [1], [0, 0, 1, 1], [], []>} : vector<64x16xbf16>, vector<16x16xbf16>, vector<64x16xf32> -> vector<64x16xf32>
    %21 = arith.subf %19, %20 : vector<64x16xf32>
    %cst_16 = arith.constant dense<0.000000e+00> : vector<64x16xf32>
    %22 = tpu.matmul %16, %17, %cst_16 {dimension_numbers = #tpu.dot_dimension_numbers<[1], [0], [0], [1], [0, 0, 1, 1], [], []>} : vector<64x16xbf16>, vector<16x16xbf16>, vector<64x16xf32> -> vector<64x16xf32>
    %cst_17 = arith.constant dense<0.000000e+00> : vector<64x16xf32>
    %23 = tpu.matmul %15, %18, %cst_17 {dimension_numbers = #tpu.dot_dimension_numbers<[1], [0], [0], [1], [0, 0, 1, 1], [], []>} : vector<64x16xbf16>, vector<16x16xbf16>, vector<64x16xf32> -> vector<64x16xf32>
    %24 = arith.addf %22, %23 : vector<64x16xf32>
    %25 = arith.mulf %21, %21 : vector<64x16xf32>
    %26 = arith.mulf %24, %24 : vector<64x16xf32>
    %27 = arith.addf %25, %26 : vector<64x16xf32>
    %28 = math.sqrt %27 : vector<64x16xf32>
    %29 = vector.shape_cast %28 : vector<64x16xf32> to vector<1x64x16xf32>
    %cst_18 = arith.constant dense<0.000000e+00> : vector<1xf32>
    %30 = vector.multi_reduction <add>, %29, %cst_18 [1, 2] : vector<1x64x16xf32> to vector<1xf32>
    %31 = vector.shape_cast %30 : vector<1xf32> to vector<1x1x1xf32>
    %32 = vector.extract %31[0, 0, 0] : f32 from vector<1x1x1xf32>
    %33 = vector.broadcast %32 : f32 to vector<1x1x1xf32>
    %c0_19 = arith.constant 0 : index
    %c0_20 = arith.constant 0 : index
    %c0_21 = arith.constant 0 : index
    %34 = vector.load %arg7[%c0_19, %c0_20, %c0_21] : memref<1x1x1xf32, #tpu.memory_space<vmem>>, vector<1x1x1xf32>
    tpu.vector_store %arg7[%c0_19, %c0_20, %c0_21], %33 {strides = array<i32>} : memref<1x1x1xf32, #tpu.memory_space<vmem>>, vector<1x1x1xf32>,
    return
  }
  func.func @transform_0(%arg0: i32) -> (i32, i32, i32) {
    %c0_i32 = arith.constant 0 : i32
    %c0_i32_0 = arith.constant 0 : i32
    %c0_i32_1 = arith.constant 0 : i32
    return %arg0, %c0_i32, %c0_i32_0 : i32, i32, i32
  }
  func.func @transform_1(%arg0: i32) -> (i32, i32, i32) {
    %c0_i32 = arith.constant 0 : i32
    %c0_i32_0 = arith.constant 0 : i32
    %c0_i32_1 = arith.constant 0 : i32
    return %arg0, %c0_i32, %c0_i32_0 : i32, i32, i32
  }
  func.func @transform_2(%arg0: i32) -> (i32, i32) {
    %c0_i32 = arith.constant 0 : i32
    %c0_i32_0 = arith.constant 0 : i32
    %c0_i32_1 = arith.constant 0 : i32
    return %c0_i32, %c0_i32_0 : i32, i32
  }
  func.func @transform_3(%arg0: i32) -> (i32, i32) {
    %c0_i32 = arith.constant 0 : i32
    %c0_i32_0 = arith.constant 0 : i32
    %c0_i32_1 = arith.constant 0 : i32
    return %c0_i32, %c0_i32_0 : i32, i32
  }
  func.func @transform_4(%arg0: i32) -> (i32, i32) {
    %c0_i32 = arith.constant 0 : i32
    %c0_i32_0 = arith.constant 0 : i32
    %c0_i32_1 = arith.constant 0 : i32
    return %c0_i32, %c0_i32_0 : i32, i32
  }
  func.func @transform_5(%arg0: i32) -> (i32, i32) {
    %c0_i32 = arith.constant 0 : i32
    %c0_i32_0 = arith.constant 0 : i32
    %c0_i32_1 = arith.constant 0 : i32
    return %c0_i32, %c0_i32_0 : i32, i32
  }
  func.func @transform_6(%arg0: i32) -> (i32, i32, i32) {
    %c0_i32 = arith.constant 0 : i32
    %c0_i32_0 = arith.constant 0 : i32
    %c0_i32_1 = arith.constant 0 : i32
    return %arg0, %c0_i32, %c0_i32_0 : i32, i32, i32
  }
}

</mosaic_0001>

<llo_original>
// kernel: fft_loss.1
$region0: #{fft_loss.1}
  #allocation0 [shape = 'u32[]', space=smem, size = 0x4, offset = 0x4, fixed_abs, tag = 'smem constant byte address 0x4 - core index']
  #allocation1 [shape = 'u32[72,128]{1,0:T(1,128)}', space=vmem, size = 0x9000, scoped, tag = 'internal scratch']
  %s0 = inlined_call_operand.hbm [shape: f32[8,16,16], index: 0, kind: input, shape index: {}]
  %s1 = inlined_call_operand.hbm [shape: f32[8,16,16], index: 1, kind: input, shape index: {}]
  %s2 = inlined_call_operand.vmem [shape: bf16[16,16], index: 2, kind: input, shape index: {}, may-alias: {2,4}]
  %s3 = inlined_call_operand.vmem [shape: bf16[16,16], index: 3, kind: input, shape index: {}, may-alias: {3,5}]
  %s4 = inlined_call_operand.vmem [shape: bf16[16,16], index: 4, kind: input, shape index: {}, may-alias: {2,4}]
  %s5 = inlined_call_operand.vmem [shape: bf16[16,16], index: 5, kind: input, shape index: {}, may-alias: {3,5}]
  %s6 = inlined_call_operand.vmem [shape: f32[2,1,1], index: 6, kind: output, shape index: {}]
  %s7 = sld [smem:[#allocation0]]
  $region65: #{fft_loss.1} parent=0
    _
  %s9 = ssub.s32 1, %s7
  %s10 = scalar_select 0, %s9, %s7
  $region1: #{fft_loss.1} parent=0
    #allocation2 [shape = 'u8[65536]{0}', space=vmem, size = 0x10000, scoped, tag = 'input window, operand 0']
    #allocation3 [shape = 's32[2]{0}', space=sflag, size = 0x8, scoped, tag = 'scoped memory for fft_loss.1']
    #allocation4 [shape = 'u8[65536]{0}', space=vmem, size = 0x10000, scoped, tag = 'input window, operand 1']
    #allocation5 [shape = 's32[2]{0}', space=sflag, size = 0x8, scoped, tag = 'scoped memory for fft_loss.1']
    %11 = vsyncpa [#allocation3], 0
    %s12 = scalar_lea.sflag [#allocation3], 1
    %13 = vsyncpa %s12, 0
    %14 = vsyncpa [#allocation5], 0
    %s15 = scalar_lea.sflag [#allocation5], 1
    %16 = vsyncpa %s15, 0
    loop: start=0, step=1, limit=4
    $region2: #{fft_loss.1} parent=1 // loop_pre_header
      _
    $region3: #{fft_loss.1} parent=1 // loop_header
      %s18 = sphi 0, %s22
      %p19 = scmp.ge.s32.totalorder %s18, 4
      %s28 = sphi 0, %s30
      %s31 = sphi 0, %s28
      %s32 = sphi 0, %s31
      %s48 = sphi 0, %s32
      %s54 = sphi 0, %s56
      %s57 = sphi 0, %s54
      %s58 = sphi 0, %s57
      %s74 = sphi 0, %s58
      %s78 = sphi 0, %s78
      %s80 = sphi 0, %s78
      %s81 = sphi 0, %s80
      %s95 = sphi 0, %s81
      %s99 = sphi 0, %s99
      %s101 = sphi 0, %s99
      %s102 = sphi 0, %s101
      %s116 = sphi 0, %s102
      %s120 = sphi 0, %s120
      %s122 = sphi 0, %s120
      %s123 = sphi 0, %s122
      %s137 = sphi 0, %s123
      %s141 = sphi 0, %s141
      %s143 = sphi 0, %s141
      %s144 = sphi 0, %s143
      %s158 = sphi 0, %s144
      %s164 = sphi 0, %s166
      %s167 = sphi 0, %s164
      %s168 = sphi 0, %s167
      %s184 = sphi 0, %s168
    $region4: #{fft_loss.1} parent=1 // loop_header_branch
      %21 = sbr.rel (%p19) target = $region8
    $region5: #{fft_loss.1} parent=1 // loop_body
      %s23 = ssub.s32 %s18, 1
      %s24 = ssub.s32 %s18, 2
      %s25 = sadd.s32 %s18, 1
      %s26 = ssub.s32 %s18, %s25
      %p27 = scmp.eq.s32.totalorder %s26, 0
      %s29 = sadd.s32 %s28, 1
      %s30 = scalar_select %p27, %s28, %s29
      %p33 = pneg %p27
      %p34 = scmp.eq.s32.totalorder %s18, 1
      %p35 = por %p33, %p34
      %p36 = scmp.ne.s32.totalorder %s28, %s31
      %p37 = scmp.eq.s32.totalorder %s18, 0
      %p38 = por %p36, %p37
      %p39 = scmp.ne.s32.totalorder %s28, %s31
      %p40 = scmp.eq.s32.totalorder %s23, 1
      %p41 = por %p39, %p40
      %p42 = scmp.ne.s32.totalorder %s31, %s32
      %p43 = scmp.eq.s32.totalorder %s23, 0
      %p44 = por %p42, %p43
      %p45 = scmp.ne.s32.totalorder %s31, %s32
      %p46 = scmp.eq.s32.totalorder %s24, 1
      %p47 = por %p45, %p46
      %p49 = scmp.ne.s32.totalorder %s32, %s48
      %p50 = scmp.eq.s32.totalorder %s24, 0
      %p51 = por %p49, %p50
      %s52 = ssub.s32 %s18, %s25
      %p53 = scmp.eq.s32.totalorder %s52, 0
      %s55 = sadd.s32 %s54, 1
      %s56 = scalar_select %p53, %s54, %s55
      %p59 = pneg %p53
      %p60 = scmp.eq.s32.totalorder %s18, 1
      %p61 = por %p59, %p60
      %p62 = scmp.ne.s32.totalorder %s54, %s57
      %p63 = scmp.eq.s32.totalorder %s18, 0
      %p64 = por %p62, %p63
      %p65 = scmp.ne.s32.totalorder %s54, %s57
      %p66 = scmp.eq.s32.totalorder %s23, 1
      %p67 = por %p65, %p66
      %p68 = scmp.ne.s32.totalorder %s57, %s58
      %p69 = scmp.eq.s32.totalorder %s23, 0
      %p70 = por %p68, %p69
      %p71 = scmp.ne.s32.totalorder %s57, %s58
      %p72 = scmp.eq.s32.totalorder %s24, 1
      %p73 = por %p71, %p72
      %p75 = scmp.ne.s32.totalorder %s58, %s74
      %p76 = scmp.eq.s32.totalorder %s24, 0
      %p77 = por %p75, %p76
      %s79 = sadd.s32 %s78, 1
      %p82 = scmp.eq.s32.totalorder %s18, 1
      %p83 = scmp.ne.s32.totalorder %s78, %s80
      %p84 = scmp.eq.s32.totalorder %s18, 0
      %p85 = por %p83, %p84
      %p86 = scmp.ne.s32.totalorder %s78, %s80
      %p87 = scmp.eq.s32.totalorder %s23, 1
      %p88 = por %p86, %p87
      %p89 = scmp.ne.s32.totalorder %s80, %s81
      %p90 = scmp.eq.s32.totalorder %s23, 0
      %p91 = por %p89, %p90
      %p92 = scmp.ne.s32.totalorder %s80, %s81
      %p93 = scmp.eq.s32.totalorder %s24, 1
      %p94 = por %p92, %p93
      %p96 = scmp.ne.s32.totalorder %s81, %s95
      %p97 = scmp.eq.s32.totalorder %s24, 0
      %p98 = por %p96, %p97
      %s100 = sadd.s32 %s99, 1
      %p103 = scmp.eq.s32.totalorder %s18, 1
      %p104 = scmp.ne.s32.totalorder %s99, %s101
      %p105 = scmp.eq.s32.totalorder %s18, 0
      %p106 = por %p104, %p105
      %p107 = scmp.ne.s32.totalorder %s99, %s101
      %p108 = scmp.eq.s32.totalorder %s23, 1
      %p109 = por %p107, %p108
      %p110 = scmp.ne.s32.totalorder %s101, %s102
      %p111 = scmp.eq.s32.totalorder %s23, 0
      %p112 = por %p110, %p111
      %p113 = scmp.ne.s32.totalorder %s101, %s102
      %p114 = scmp.eq.s32.totalorder %s24, 1
      %p115 = por %p113, %p114
      %p117 = scmp.ne.s32.totalorder %s102, %s116
      %p118 = scmp.eq.s32.totalorder %s24, 0
      %p119 = por %p117, %p118
      %s121 = sadd.s32 %s120, 1
      %p124 = scmp.eq.s32.totalorder %s18, 1
      %p125 = scmp.ne.s32.totalorder %s120, %s122
      %p126 = scmp.eq.s32.totalorder %s18, 0
      %p127 = por %p125, %p126
      %p128 = scmp.ne.s32.totalorder %s120, %s122
      %p129 = scmp.eq.s32.totalorder %s23, 1
      %p130 = por %p128, %p129
      %p131 = scmp.ne.s32.totalorder %s122, %s123
      %p132 = scmp.eq.s32.totalorder %s23, 0
      %p133 = por %p131, %p132
      %p134 = scmp.ne.s32.totalorder %s122, %s123
      %p135 = scmp.eq.s32.totalorder %s24, 1
      %p136 = por %p134, %p135
      %p138 = scmp.ne.s32.totalorder %s123, %s137
      %p139 = scmp.eq.s32.totalorder %s24, 0
      %p140 = por %p138, %p139
      %s142 = sadd.s32 %s141, 1
      %p145 = scmp.eq.s32.totalorder %s18, 1
      %p146 = scmp.ne.s32.totalorder %s141, %s143
      %p147 = scmp.eq.s32.totalorder %s18, 0
      %p148 = por %p146, %p147
      %p149 = scmp.ne.s32.totalorder %s141, %s143
      %p150 = scmp.eq.s32.totalorder %s23, 1
      %p151 = por %p149, %p150
      %p152 = scmp.ne.s32.totalorder %s143, %s144
      %p153 = scmp.eq.s32.totalorder %s23, 0
      %p154 = por %p152, %p153
      %p155 = scmp.ne.s32.totalorder %s143, %s144
      %p156 = scmp.eq.s32.totalorder %s24, 1
      %p157 = por %p155, %p156
      %p159 = scmp.ne.s32.totalorder %s144, %s158
      %p160 = scmp.eq.s32.totalorder %s24, 0
      %p161 = por %p159, %p160
      %s162 = ssub.s32 %s18, %s25
      %p163 = scmp.eq.s32.totalorder %s162, 0
      %s165 = sadd.s32 %s164, 1
      %s166 = scalar_select %p163, %s164, %s165
      %p169 = pneg %p163
      %p170 = scmp.eq.s32.totalorder %s18, 1
      %p171 = por %p169, %p170
      %p172 = scmp.ne.s32.totalorder %s164, %s167
      %p173 = scmp.eq.s32.totalorder %s18, 0
      %p174 = por %p172, %p173
      %p175 = scmp.ne.s32.totalorder %s164, %s167
      %p176 = scmp.eq.s32.totalorder %s23, 1
      %p177 = por %p175, %p176
      %p178 = scmp.ne.s32.totalorder %s167, %s168
      %p179 = scmp.eq.s32.totalorder %s23, 0
      %p180 = por %p178, %p179
      %p181 = scmp.ne.s32.totalorder %s167, %s168
      %p182 = scmp.eq.s32.totalorder %s24, 1
      %p183 = por %p181, %p182
      %p185 = scmp.ne.s32.totalorder %s168, %s184
      %p186 = scmp.eq.s32.totalorder %s24, 0
      %p187 = por %p185, %p186
      %p188 = scmp.le.s32.totalorder 1, %s18
      %p189 = scmp.lt.s32.totalorder %s18, 3
      %p190 = pnand %p188, %p189
      %p191 = pneg %p190
      // Predicated region
      $region9: #{fft_loss.1} parent=5 // pred_check
        _
      $region10: #{fft_loss.1} parent=5 // pred_check_branch
        %193 = sbr.rel (%p190) target = $region12
      $region11: #{fft_loss.1} parent=5 // pred_region
        %s194 = ssub.s32 %s18, 1
        // Predicated region
        $region13: #{fft_loss.1} parent=11 // pred_check
          %p195 = pneg %p91
        $region14: #{fft_loss.1} parent=11 // pred_check_branch
          %197 = sbr.rel (%p195) target = $region16
        $region15: #{fft_loss.1} parent=11 // pred_region
          _
        $region16: #{fft_loss.1} parent=11 // pred_fallthru
          _
        // Predicated region
        $region17: #{fft_loss.1} parent=11 // pred_check
          %p198 = pneg %p112
        $region18: #{fft_loss.1} parent=11 // pred_check_branch
          %200 = sbr.rel (%p198) target = $region20
        $region19: #{fft_loss.1} parent=11 // pred_region
          _
        $region20: #{fft_loss.1} parent=11 // pred_fallthru
          _
        // Predicated region
        $region21: #{fft_loss.1} parent=11 // pred_check
          %p201 = pneg %p133
        $region22: #{fft_loss.1} parent=11 // pred_check_branch
          %203 = sbr.rel (%p201) target = $region24
        $region23: #{fft_loss.1} parent=11 // pred_region
          _
        $region24: #{fft_loss.1} parent=11 // pred_fallthru
          _
        // Predicated region
        $region25: #{fft_loss.1} parent=11 // pred_check
          %p204 = pneg %p154
        $region26: #{fft_loss.1} parent=11 // pred_check_branch
          %206 = sbr.rel (%p204) target = $region28
        $region27: #{fft_loss.1} parent=11 // pred_region
          _
        $region28: #{fft_loss.1} parent=11 // pred_fallthru
          _
      $region12: #{fft_loss.1} parent=5 // pred_fallthru
        _
      %p207 = scmp.lt.s32.totalorder %s18, 2
      // Predicated region
      $region29: #{fft_loss.1} parent=5 // pred_check
        %p208 = pneg %p207
      $region30: #{fft_loss.1} parent=5 // pred_check_branch
        %210 = sbr.rel (%p208) target = $region32
      $region31: #{fft_loss.1} parent=5 // pred_region
        // Predicated region
        $region33: #{fft_loss.1} parent=31 // pred_check
          %p211 = pneg %p38
        $region34: #{fft_loss.1} parent=31 // pred_check_branch
          %213 = sbr.rel (%p211) target = $region36
        $region35: #{fft_loss.1} parent=31 // pred_region
          %s214 = sand.u32 %s28, 1
          %s215 = scalar_lea.sflag [#allocation3], %s214
          %s216 = sand.u32 %s28, 1
          %s217 = smul.addr %s216, 64
          %s218 = scalar_lea.vmem [#allocation2], %s217
          %s219 = smul.u32 4, %s18
          %221 = vsyncadd %s215, 0
          %s222 = smul.addr %s219, 2
          %s223 = smul.addr %s222, 8
          %s224 = scalar_lea.hbm %s0, %s223
          %s225 = sshll.u32 %s224, 4
          %s226 = int_to_ptr.hbm [resolvable:$true] %s225
          %s227 = sshll.u32 %s218, 4
          %s228 = int_to_ptr.vmem [resolvable:$true] %s227
          %233 = dma.hbm_to_vmem [thread:$0]  %s226, 1024, %s228, %s215, 128, 128, 8
        $region36: #{fft_loss.1} parent=31 // pred_fallthru
          _
        // Predicated region
        $region37: #{fft_loss.1} parent=31 // pred_check
          %p234 = pneg %p64
        $region38: #{fft_loss.1} parent=31 // pred_check_branch
          %236 = sbr.rel (%p234) target = $region40
        $region39: #{fft_loss.1} parent=31 // pred_region
          %s237 = sand.u32 %s54, 1
          %s238 = scalar_lea.sflag [#allocation5], %s237
          %s239 = sand.u32 %s54, 1
          %s240 = smul.addr %s239, 64
          %s241 = scalar_lea.vmem [#allocation4], %s240
          %s242 = smul.u32 4, %s18
          %244 = vsyncadd %s238, 0
          %s245 = smul.addr %s242, 2
          %s246 = smul.addr %s245, 8
          %s247 = scalar_lea.hbm %s1, %s246
          %s248 = sshll.u32 %s247, 4
          %s249 = int_to_ptr.hbm [resolvable:$true] %s248
          %s250 = sshll.u32 %s241, 4
          %s251 = int_to_ptr.vmem [resolvable:$true] %s250
          %256 = dma.hbm_to_vmem [thread:$0]  %s249, 1024, %s251, %s238, 128, 128, 8
        $region40: #{fft_loss.1} parent=31 // pred_fallthru
          _
      $region32: #{fft_loss.1} parent=5 // pred_fallthru
        _
      %p257 = scmp.le.s32.totalorder 1, %s18
      %p258 = scmp.lt.s32.totalorder %s18, 3
      %p259 = pnand %p257, %p258
      %p260 = pneg %p259
      // Predicated region
      $region41: #{fft_loss.1} parent=5 // pred_check
        _
      $region42: #{fft_loss.1} parent=5 // pred_check_branch
        %262 = sbr.rel (%p259) target = $region44
      $region43: #{fft_loss.1} parent=5 // pred_region
        %s263 = ssub.s32 %s18, 1
        %s264 = sand.u32 %s31, 1
        %s265 = scalar_lea.sflag [#allocation3], %s264
        %s266 = sand.u32 %s31, 1
        %s267 = smul.addr %s266, 64
        %s268 = scalar_lea.vmem [#allocation2], %s267
        // Predicated region
        $region45: #{fft_loss.1} parent=43 // pred_check
          %p269 = pneg %p44
        $region46: #{fft_loss.1} parent=43 // pred_check_branch
          %271 = sbr.rel (%p269) target = $region48
        $region47: #{fft_loss.1} parent=43 // pred_region
          %273 = dma.done %s265, 1024
        $region48: #{fft_loss.1} parent=43 // pred_fallthru
          _
        %s274 = sand.u32 %s57, 1
        %s275 = scalar_lea.sflag [#allocation5], %s274
        %s276 = sand.u32 %s57, 1
        %s277 = smul.addr %s276, 64
        %s278 = scalar_lea.vmem [#allocation4], %s277
        // Predicated region
        $region49: #{fft_loss.1} parent=43 // pred_check
          %p279 = pneg %p70
        $region50: #{fft_loss.1} parent=43 // pred_check_branch
          %281 = sbr.rel (%p279) target = $region52
        $region51: #{fft_loss.1} parent=43 // pred_region
          %283 = dma.done %s275, 1024
        $region52: #{fft_loss.1} parent=43 // pred_fallthru
          _
        %s284 = sand.u32 %s31, 1
        %s285 = scalar_lea.sflag [#allocation3], %s284
        %s286 = sand.u32 %s31, 1
        %s287 = smul.addr %s286, 64
        %s288 = scalar_lea.vmem [#allocation2], %s287
        %p289 = pneg %p44
        %p290 = pneg %p41
        %s291 = sand.u32 %s57, 1
        %s292 = scalar_lea.sflag [#allocation5], %s291
        %s293 = sand.u32 %s57, 1
        %s294 = smul.addr %s293, 64
        %s295 = scalar_lea.vmem [#allocation4], %s294
        %p296 = pneg %p70
        %p297 = pneg %p67
        %p298 = pneg %p91
        %p299 = pneg %p88
        %p300 = pneg %p112
        %p301 = pneg %p109
        %p302 = pneg %p133
        %p303 = pneg %p130
        %p304 = pneg %p154
        %p305 = pneg %p151
        %p306 = pneg %p180
        %p307 = pneg %p177
        %p308 = scmp.lt.s32.totalorder %s23, 1
        %s309 = scalar_select %p308, %s23, 1
        %s310 = scalar_lea.vmem %s6, %s309
        %s311 = smul.u32 4, %s23
        %s312 = smul.u32 4, %s23
        %p313 = scmp.lt.s32.totalorder %s23, 1
        %s314 = scalar_select %p313, %s23, 1
        %s315 = scalar_lea.vmem %s6, %s314
        %v317 = vld [vmem:[%s268] sm:$0xff]
        %v318 = vld [vmem:[%s268 + $0x8] sm:$0xff]
        %v319 = vld [vmem:[%s268 + $0x10] sm:$0xff]
        %v320 = vld [vmem:[%s268 + $0x18] sm:$0xff]
        %v321 = vld [vmem:[%s268 + $0x20] sm:$0xff]
        %v322 = vld [vmem:[%s268 + $0x28] sm:$0xff]
        %v323 = vld [vmem:[%s268 + $0x30] sm:$0xff]
        %v324 = vld [vmem:[%s268 + $0x38] sm:$0xff]
        %v325 = vld [vmem:[%s278] sm:$0xff]
        %v326 = vld [vmem:[%s278 + $0x8] sm:$0xff]
        %v327 = vld [vmem:[%s278 + $0x10] sm:$0xff]
        %v328 = vld [vmem:[%s278 + $0x18] sm:$0xff]
        %v329 = vld [vmem:[%s278 + $0x20] sm:$0xff]
        %v330 = vld [vmem:[%s278 + $0x28] sm:$0xff]
        %v331 = vld [vmem:[%s278 + $0x30] sm:$0xff]
        %v332 = vld [vmem:[%s278 + $0x38] sm:$0xff]
        %v333 = vsub.f32 %v317, %v325
        %v334 = vsub.f32 %v318, %v326
        %v335 = vsub.f32 %v319, %v327
        %v336 = vsub.f32 %v320, %v328
        %v337 = vsub.f32 %v321, %v329
        %v338 = vsub.f32 %v322, %v330
        %v339 = vsub.f32 %v323, %v331
        %v340 = vsub.f32 %v324, %v332
        %v341 = vpack.c.bf16 %v333, %v333
        %v342 = vpack.c.bf16 %v334, %v334
        %v343 = vpack.c.bf16 %v335, %v335
        %v344 = vpack.c.bf16 %v336, %v336
        %v345 = vpack.c.bf16 %v337, %v337
        %v346 = vpack.c.bf16 %v338, %v338
        %v347 = vpack.c.bf16 %v339, %v339
        %v348 = vpack.c.bf16 %v340, %v340
        %v349 = vld [vmem:[%s2] sm:$0xf]
        %v350 = vld [vmem:[%s2 + $0x4] sm:$0xf]
        %v359 = vunpack.c.l.b16 %v341
        %v360 = vunpack.c.l.b16 %v342
        %v361 = vunpack.c.l.b16 %v343
        %v362 = vunpack.c.l.b16 %v344
        %v363 = vunpack.c.l.b16 %v345
        %v364 = vunpack.c.l.b16 %v346
        %v365 = vunpack.c.l.b16 %v347
        %v366 = vunpack.c.l.b16 %v348
        %v367 = vpack.c.b16 %v360, %v359
        %v368 = vpack.c.b16 %v362, %v361
        %v369 = vpack.c.b16 %v364, %v363
        %v370 = vpack.c.b16 %v366, %v365
        %v373 = vunpack.c.l.b16 %v349
        %v374 = vunpack.c.l.b16 %v350
        %v375 = vpack.c.b16 %v374, %v373
        %vm377 = vcmask 130048
        %v379 = vsel %vm377, %v367, 0
        %v382 = vsel %vm377, %v368, 0
        %v385 = vsel %vm377, %v369, 0
        %v388 = vsel %vm377, %v370, 0
        %390 = vmatpush.bf16.msra.mxu0 0
        %391 = vmatpush.bf16.msra.mxu0 0
        %392 = vmatpush.bf16.msra.mxu0 0
        %393 = vmatpush.bf16.msra.mxu0 0
        %394 = vmatpush.bf16.msra.mxu0 0
        %395 = vmatpush.bf16.msra.mxu0 0
        %396 = vmatpush.bf16.msra.mxu0 0
        %397 = vmatpush.bf16.msra.mxu0 %v375
        %398 = vmatmul.bf16.gmra.mxu0 %v379
        %v399 = vpop.f32.mrf.mxu0
        %v400 = vadd.f32 0.0, %v399
        %v401 = vpop.f32.mrf.mxu0
        %v402 = vadd.f32 0.0, %v401
        %403 = vmatmul.bf16.gmra.mxu0 %v382
        %v404 = vpop.f32.mrf.mxu0
        %v405 = vadd.f32 0.0, %v404
        %v406 = vpop.f32.mrf.mxu0
        %v407 = vadd.f32 0.0, %v406
        %408 = vmatmul.bf16.gmra.mxu0 %v385
        %v409 = vpop.f32.mrf.mxu0
        %v410 = vadd.f32 0.0, %v409
        %v411 = vpop.f32.mrf.mxu0
        %v412 = vadd.f32 0.0, %v411
        %413 = vmatmul.bf16.gmra.mxu0 %v388
        %v414 = vpop.f32.mrf.mxu0
        %v415 = vadd.f32 0.0, %v414
        %v416 = vpop.f32.mrf.mxu0
        %v417 = vadd.f32 0.0, %v416
        %418 = vdwg.mxu0
        %v419 = vld [vmem:[%s3] sm:$0xf]
        %v420 = vld [vmem:[%s3 + $0x4] sm:$0xf]
        %v423 = vunpack.c.l.b16 %v419
        %v424 = vunpack.c.l.b16 %v420
        %v425 = vpack.c.b16 %v424, %v423
        %427 = vmatpush.bf16.msra.mxu0 0
        %428 = vmatpush.bf16.msra.mxu0 0
        %429 = vmatpush.bf16.msra.mxu0 0
        %430 = vmatpush.bf16.msra.mxu0 0
        %431 = vmatpush.bf16.msra.mxu0 0
        %432 = vmatpush.bf16.msra.mxu0 0
        %433 = vmatpush.bf16.msra.mxu0 0
        %434 = vmatpush.bf16.msra.mxu0 %v425
        %435 = vmatmul.bf16.gmra.mxu0 %v379
        %v436 = vpop.f32.mrf.mxu0
        %v437 = vadd.f32 0.0, %v436
        %v438 = vpop.f32.mrf.mxu0
        %v439 = vadd.f32 0.0, %v438
        %440 = vmatmul.bf16.gmra.mxu0 %v382
        %v441 = vpop.f32.mrf.mxu0
        %v442 = vadd.f32 0.0, %v441
        %v443 = vpop.f32.mrf.mxu0
        %v444 = vadd.f32 0.0, %v443
        %445 = vmatmul.bf16.gmra.mxu0 %v385
        %v446 = vpop.f32.mrf.mxu0
        %v447 = vadd.f32 0.0, %v446
        %v448 = vpop.f32.mrf.mxu0
        %v449 = vadd.f32 0.0, %v448
        %450 = vmatmul.bf16.gmra.mxu0 %v388
        %v451 = vpop.f32.mrf.mxu0
        %v452 = vadd.f32 0.0, %v451
        %v453 = vpop.f32.mrf.mxu0
        %v454 = vadd.f32 0.0, %v453
        %455 = vdwg.mxu0
        %456 = vxpose.xlu0.b32.start [1/16] %v400, 128
        %457 = vxpose.xlu0.b32.cont [2/16] %v402, 128
        %458 = vxpose.xlu0.b32.cont [3/16] 0.0, 128
        %459 = vxpose.xlu0.b32.cont [4/16] 0.0, 128
        %460 = vxpose.xlu0.b32.cont [5/16] 0.0, 128
        %461 = vxpose.xlu0.b32.cont [6/16] 0.0, 128
        %462 = vxpose.xlu0.b32.cont [7/16] 0.0, 128
        %463 = vxpose.xlu0.b32.cont [8/16] 0.0, 128
        %464 = vxpose.xlu0.b32.cont [9/16] 0.0, 128
        %465 = vxpose.xlu0.b32.cont [10/16] 0.0, 128
        %466 = vxpose.xlu0.b32.cont [11/16] 0.0, 128
        %467 = vxpose.xlu0.b32.cont [12/16] 0.0, 128
        %468 = vxpose.xlu0.b32.cont [13/16] 0.0, 128
        %469 = vxpose.xlu0.b32.cont [14/16] 0.0, 128
        %470 = vxpose.xlu0.b32.cont [15/16] 0.0, 128
        %471 = vxpose.xlu0.b32.end [16/16] 0.0, 128
        %v472 = vpop.trf.xlu0
        %v473 = vpop.trf.xlu0
        %v474 = vpop.trf.xlu0
        %v475 = vpop.trf.xlu0
        %v476 = vpop.trf.xlu0
        %v477 = vpop.trf.xlu0
        %v478 = vpop.trf.xlu0
        %v479 = vpop.trf.xlu0
        %v480 = vpop.trf.xlu0
        %v481 = vpop.trf.xlu0
        %v482 = vpop.trf.xlu0
        %v483 = vpop.trf.xlu0
        %v484 = vpop.trf.xlu0
        %v485 = vpop.trf.xlu0
        %v486 = vpop.trf.xlu0
        %v487 = vpop.trf.xlu0
        %488 = vxpose.xlu0.b32.start [1/16] %v405, 128
        %489 = vxpose.xlu0.b32.cont [2/16] %v407, 128
        %490 = vxpose.xlu0.b32.cont [3/16] 0.0, 128
        %491 = vxpose.xlu0.b32.cont [4/16] 0.0, 128
        %492 = vxpose.xlu0.b32.cont [5/16] 0.0, 128
        %493 = vxpose.xlu0.b32.cont [6/16] 0.0, 128
        %494 = vxpose.xlu0.b32.cont [7/16] 0.0, 128
        %495 = vxpose.xlu0.b32.cont [8/16] 0.0, 128
        %496 = vxpose.xlu0.b32.cont [9/16] 0.0, 128
        %497 = vxpose.xlu0.b32.cont [10/16] 0.0, 128
        %498 = vxpose.xlu0.b32.cont [11/16] 0.0, 128
        %499 = vxpose.xlu0.b32.cont [12/16] 0.0, 128
        %500 = vxpose.xlu0.b32.cont [13/16] 0.0, 128
        %501 = vxpose.xlu0.b32.cont [14/16] 0.0, 128
        %502 = vxpose.xlu0.b32.cont [15/16] 0.0, 128
        %503 = vxpose.xlu0.b32.end [16/16] 0.0, 128
        %v504 = vpop.trf.xlu0
        %v505 = vpop.trf.xlu0
        %v506 = vpop.trf.xlu0
        %v507 = vpop.trf.xlu0
        %v508 = vpop.trf.xlu0
        %v509 = vpop.trf.xlu0
        %v510 = vpop.trf.xlu0
        %v511 = vpop.trf.xlu0
        %v512 = vpop.trf.xlu0
        %v513 = vpop.trf.xlu0
        %v514 = vpop.trf.xlu0
        %v515 = vpop.trf.xlu0
        %v516 = vpop.trf.xlu0
        %v517 = vpop.trf.xlu0
        %v518 = vpop.trf.xlu0
        %v519 = vpop.trf.xlu0
        %520 = vxpose.xlu0.b32.start [1/16] %v410, 128
        %521 = vxpose.xlu0.b32.cont [2/16] %v412, 128
        %522 = vxpose.xlu0.b32.cont [3/16] 0.0, 128
        %523 = vxpose.xlu0.b32.cont [4/16] 0.0, 128
        %524 = vxpose.xlu0.b32.cont [5/16] 0.0, 128
        %525 = vxpose.xlu0.b32.cont [6/16] 0.0, 128
        %526 = vxpose.xlu0.b32.cont [7/16] 0.0, 128
        %527 = vxpose.xlu0.b32.cont [8/16] 0.0, 128
        %528 = vxpose.xlu0.b32.cont [9/16] 0.0, 128
        %529 = vxpose.xlu0.b32.cont [10/16] 0.0, 128
        %530 = vxpose.xlu0.b32.cont [11/16] 0.0, 128
        %531 = vxpose.xlu0.b32.cont [12/16] 0.0, 128
        %532 = vxpose.xlu0.b32.cont [13/16] 0.0, 128
        %533 = vxpose.xlu0.b32.cont [14/16] 0.0, 128
        %534 = vxpose.xlu0.b32.cont [15/16] 0.0, 128
        %535 = vxpose.xlu0.b32.end [16/16] 0.0, 128
        %v536 = vpop.trf.xlu0
        %v537 = vpop.trf.xlu0
        %v538 = vpop.trf.xlu0
        %v539 = vpop.trf.xlu0
        %v540 = vpop.trf.xlu0
        %v541 = vpop.trf.xlu0
        %v542 = vpop.trf.xlu0
        %v543 = vpop.trf.xlu0
        %v544 = vpop.trf.xlu0
        %v545 = vpop.trf.xlu0
        %v546 = vpop.trf.xlu0
        %v547 = vpop.trf.xlu0
        %v548 = vpop.trf.xlu0
        %v549 = vpop.trf.xlu0
        %v550 = vpop.trf.xlu0
        %v551 = vpop.trf.xlu0
        %552 = vxpose.xlu0.b32.start [1/16] %v415, 128
        %553 = vxpose.xlu0.b32.cont [2/16] %v417, 128
        %554 = vxpose.xlu0.b32.cont [3/16] 0.0, 128
        %555 = vxpose.xlu0.b32.cont [4/16] 0.0, 128
        %556 = vxpose.xlu0.b32.cont [5/16] 0.0, 128
        %557 = vxpose.xlu0.b32.cont [6/16] 0.0, 128
        %558 = vxpose.xlu0.b32.cont [7/16] 0.0, 128
        %559 = vxpose.xlu0.b32.cont [8/16] 0.0, 128
        %560 = vxpose.xlu0.b32.cont [9/16] 0.0, 128
        %561 = vxpose.xlu0.b32.cont [10/16] 0.0, 128
        %562 = vxpose.xlu0.b32.cont [11/16] 0.0, 128
        %563 = vxpose.xlu0.b32.cont [12/16] 0.0, 128
        %564 = vxpose.xlu0.b32.cont [13/16] 0.0, 128
        %565 = vxpose.xlu0.b32.cont [14/16] 0.0, 128
        %566 = vxpose.xlu0.b32.cont [15/16] 0.0, 128
        %567 = vxpose.xlu0.b32.end [16/16] 0.0, 128
        %v568 = vpop.trf.xlu0
        %v569 = vpop.trf.xlu0
        %v570 = vpop.trf.xlu0
        %v571 = vpop.trf.xlu0
        %v572 = vpop.trf.xlu0
        %v573 = vpop.trf.xlu0
        %v574 = vpop.trf.xlu0
        %v575 = vpop.trf.xlu0
        %v576 = vpop.trf.xlu0
        %v577 = vpop.trf.xlu0
        %v578 = vpop.trf.xlu0
        %v579 = vpop.trf.xlu0
        %v580 = vpop.trf.xlu0
        %v581 = vpop.trf.xlu0
        %v582 = vpop.trf.xlu0
        %v583 = vpop.trf.xlu0
        %584 = vxpose.xlu0.b32.start [1/16] %v437, 128
        %585 = vxpose.xlu0.b32.cont [2/16] %v439, 128
        %586 = vxpose.xlu0.b32.cont [3/16] 0.0, 128
        %587 = vxpose.xlu0.b32.cont [4/16] 0.0, 128
        %588 = vxpose.xlu0.b32.cont [5/16] 0.0, 128
        %589 = vxpose.xlu0.b32.cont [6/16] 0.0, 128
        %590 = vxpose.xlu0.b32.cont [7/16] 0.0, 128
        %591 = vxpose.xlu0.b32.cont [8/16] 0.0, 128
        %592 = vxpose.xlu0.b32.cont [9/16] 0.0, 128
        %593 = vxpose.xlu0.b32.cont [10/16] 0.0, 128
        %594 = vxpose.xlu0.b32.cont [11/16] 0.0, 128
        %595 = vxpose.xlu0.b32.cont [12/16] 0.0, 128
        %596 = vxpose.xlu0.b32.cont [13/16] 0.0, 128
        %597 = vxpose.xlu0.b32.cont [14/16] 0.0, 128
        %598 = vxpose.xlu0.b32.cont [15/16] 0.0, 128
        %599 = vxpose.xlu0.b32.end [16/16] 0.0, 128
        %v600 = vpop.trf.xlu0
        %v601 = vpop.trf.xlu0
        %v602 = vpop.trf.xlu0
        %v603 = vpop.trf.xlu0
        %v604 = vpop.trf.xlu0
        %v605 = vpop.trf.xlu0
        %v606 = vpop.trf.xlu0
        %v607 = vpop.trf.xlu0
        %v608 = vpop.trf.xlu0
        %v609 = vpop.trf.xlu0
        %v610 = vpop.trf.xlu0
        %v611 = vpop.trf.xlu0
        %v612 = vpop.trf.xlu0
        %v613 = vpop.trf.xlu0
        %v614 = vpop.trf.xlu0
        %v615 = vpop.trf.xlu0
        %616 = vxpose.xlu0.b32.start [1/16] %v442, 128
        %617 = vxpose.xlu0.b32.cont [2/16] %v444, 128
        %618 = vxpose.xlu0.b32.cont [3/16] 0.0, 128
        %619 = vxpose.xlu0.b32.cont [4/16] 0.0, 128
        %620 = vxpose.xlu0.b32.cont [5/16] 0.0, 128
        %621 = vxpose.xlu0.b32.cont [6/16] 0.0, 128
        %622 = vxpose.xlu0.b32.cont [7/16] 0.0, 128
        %623 = vxpose.xlu0.b32.cont [8/16] 0.0, 128
        %624 = vxpose.xlu0.b32.cont [9/16] 0.0, 128
        %625 = vxpose.xlu0.b32.cont [10/16] 0.0, 128
        %626 = vxpose.xlu0.b32.cont [11/16] 0.0, 128
        %627 = vxpose.xlu0.b32.cont [12/16] 0.0, 128
        %628 = vxpose.xlu0.b32.cont [13/16] 0.0, 128
        %629 = vxpose.xlu0.b32.cont [14/16] 0.0, 128
        %630 = vxpose.xlu0.b32.cont [15/16] 0.0, 128
        %631 = vxpose.xlu0.b32.end [16/16] 0.0, 128
        %v632 = vpop.trf.xlu0
        %v633 = vpop.trf.xlu0
        %v634 = vpop.trf.xlu0
        %v635 = vpop.trf.xlu0
        %v636 = vpop.trf.xlu0
        %v637 = vpop.trf.xlu0
        %v638 = vpop.trf.xlu0
        %v639 = vpop.trf.xlu0
        %v640 = vpop.trf.xlu0
        %v641 = vpop.trf.xlu0
        %v642 = vpop.trf.xlu0
        %v643 = vpop.trf.xlu0
        %v644 = vpop.trf.xlu0
        %v645 = vpop.trf.xlu0
        %v646 = vpop.trf.xlu0
        %v647 = vpop.trf.xlu0
        %648 = vxpose.xlu0.b32.start [1/16] %v447, 128
        %649 = vxpose.xlu0.b32.cont [2/16] %v449, 128
        %650 = vxpose.xlu0.b32.cont [3/16] 0.0, 128
        %651 = vxpose.xlu0.b32.cont [4/16] 0.0, 128
        %652 = vxpose.xlu0.b32.cont [5/16] 0.0, 128
        %653 = vxpose.xlu0.b32.cont [6/16] 0.0, 128
        %654 = vxpose.xlu0.b32.cont [7/16] 0.0, 128
        %655 = vxpose.xlu0.b32.cont [8/16] 0.0, 128
        %656 = vxpose.xlu0.b32.cont [9/16] 0.0, 128
        %657 = vxpose.xlu0.b32.cont [10/16] 0.0, 128
        %658 = vxpose.xlu0.b32.cont [11/16] 0.0, 128
        %659 = vxpose.xlu0.b32.cont [12/16] 0.0, 128
        %660 = vxpose.xlu0.b32.cont [13/16] 0.0, 128
        %661 = vxpose.xlu0.b32.cont [14/16] 0.0, 128
        %662 = vxpose.xlu0.b32.cont [15/16] 0.0, 128
        %663 = vxpose.xlu0.b32.end [16/16] 0.0, 128
        %v664 = vpop.trf.xlu0
        %v665 = vpop.trf.xlu0
        %v666 = vpop.trf.xlu0
        %v667 = vpop.trf.xlu0
        %v668 = vpop.trf.xlu0
        %v669 = vpop.trf.xlu0
        %v670 = vpop.trf.xlu0
        %v671 = vpop.trf.xlu0
        %v672 = vpop.trf.xlu0
        %v673 = vpop.trf.xlu0
        %v674 = vpop.trf.xlu0
        %v675 = vpop.trf.xlu0
        %v676 = vpop.trf.xlu0
        %v677 = vpop.trf.xlu0
        %v678 = vpop.trf.xlu0
        %v679 = vpop.trf.xlu0
        %680 = vxpose.xlu0.b32.start [1/16] %v452, 128
        %681 = vxpose.xlu0.b32.cont [2/16] %v454, 128
        %682 = vxpose.xlu0.b32.cont [3/16] 0.0, 128
        %683 = vxpose.xlu0.b32.cont [4/16] 0.0, 128
        %684 = vxpose.xlu0.b32.cont [5/16] 0.0, 128
        %685 = vxpose.xlu0.b32.cont [6/16] 0.0, 128
        %686 = vxpose.xlu0.b32.cont [7/16] 0.0, 128
        %687 = vxpose.xlu0.b32.cont [8/16] 0.0, 128
        %688 = vxpose.xlu0.b32.cont [9/16] 0.0, 128
        %689 = vxpose.xlu0.b32.cont [10/16] 0.0, 128
        %690 = vxpose.xlu0.b32.cont [11/16] 0.0, 128
        %691 = vxpose.xlu0.b32.cont [12/16] 0.0, 128
        %692 = vxpose.xlu0.b32.cont [13/16] 0.0, 128
        %693 = vxpose.xlu0.b32.cont [14/16] 0.0, 128
        %694 = vxpose.xlu0.b32.cont [15/16] 0.0, 128
        %695 = vxpose.xlu0.b32.end [16/16] 0.0, 128
        %v696 = vpop.trf.xlu0
        %v697 = vpop.trf.xlu0
        %v698 = vpop.trf.xlu0
        %v699 = vpop.trf.xlu0
        %v700 = vpop.trf.xlu0
        %v701 = vpop.trf.xlu0
        %v702 = vpop.trf.xlu0
        %v703 = vpop.trf.xlu0
        %v704 = vpop.trf.xlu0
        %v705 = vpop.trf.xlu0
        %v706 = vpop.trf.xlu0
        %v707 = vpop.trf.xlu0
        %v708 = vpop.trf.xlu0
        %v709 = vpop.trf.xlu0
        %v710 = vpop.trf.xlu0
        %v711 = vpop.trf.xlu0
        %v712 = vpack.c.bf16 %v473, %v472
        %v713 = vpack.c.bf16 %v505, %v504
        %v714 = vpack.c.bf16 %v537, %v536
        %v715 = vpack.c.bf16 %v569, %v568
        %v716 = vpack.c.bf16 %v601, %v600
        %v717 = vpack.c.bf16 %v633, %v632
        %v718 = vpack.c.bf16 %v665, %v664
        %v719 = vpack.c.bf16 %v697, %v696
        %v720 = vld [vmem:[%s4] sm:$0xf]
        %v721 = vld [vmem:[%s4 + $0x4] sm:$0xf]
        %v722 = vld [vmem:[%s5] sm:$0xf]
        %v723 = vld [vmem:[%s5 + $0x4] sm:$0xf]
        %v726 = vunpack.c.l.b16 %v720
        %v727 = vunpack.c.l.b16 %v721
        %v728 = vpack.c.b16 %v727, %v726
        %v731 = vsel %vm377, %v712, 0
        %v734 = vsel %vm377, %v713, 0
        %v737 = vsel %vm377, %v714, 0
        %v740 = vsel %vm377, %v715, 0
        %742 = vmatpush.bf16.msra.mxu0 0
        %743 = vmatpush.bf16.msra.mxu0 0
        %744 = vmatpush.bf16.msra.mxu0 0
        %745 = vmatpush.bf16.msra.mxu0 0
        %746 = vmatpush.bf16.msra.mxu0 0
        %747 = vmatpush.bf16.msra.mxu0 0
        %748 = vmatpush.bf16.msra.mxu0 0
        %749 = vmatpush.bf16.msra.mxu0 %v728
        %750 = vmatmul.bf16.gmra.mxu0 %v731
        %v751 = vpop.f32.mrf.mxu0
        %v752 = vadd.f32 0.0, %v751
        %v753 = vpop.f32.mrf.mxu0
        %v754 = vadd.f32 0.0, %v753
        %755 = vmatmul.bf16.gmra.mxu0 %v734
        %v756 = vpop.f32.mrf.mxu0
        %v757 = vadd.f32 0.0, %v756
        %v758 = vpop.f32.mrf.mxu0
        %v759 = vadd.f32 0.0, %v758
        %760 = vmatmul.bf16.gmra.mxu0 %v737
        %v761 = vpop.f32.mrf.mxu0
        %v762 = vadd.f32 0.0, %v761
        %v763 = vpop.f32.mrf.mxu0
        %v764 = vadd.f32 0.0, %v763
        %765 = vmatmul.bf16.gmra.mxu0 %v740
        %v766 = vpop.f32.mrf.mxu0
        %v767 = vadd.f32 0.0, %v766
        %v768 = vpop.f32.mrf.mxu0
        %v769 = vadd.f32 0.0, %v768
        %770 = vdwg.mxu0
        %v773 = vunpack.c.l.b16 %v722
        %v774 = vunpack.c.l.b16 %v723
        %v775 = vpack.c.b16 %v774, %v773
        %v778 = vsel %vm377, %v716, 0
        %v781 = vsel %vm377, %v717, 0
        %v784 = vsel %vm377, %v718, 0
        %v787 = vsel %vm377, %v719, 0
        %789 = vmatpush.bf16.msra.mxu0 0
        %790 = vmatpush.bf16.msra.mxu0 0
        %791 = vmatpush.bf16.msra.mxu0 0
        %792 = vmatpush.bf16.msra.mxu0 0
        %793 = vmatpush.bf16.msra.mxu0 0
        %794 = vmatpush.bf16.msra.mxu0 0
        %795 = vmatpush.bf16.msra.mxu0 0
        %796 = vmatpush.bf16.msra.mxu0 %v775
        %797 = vmatmul.bf16.gmra.mxu0 %v778
        %v798 = vpop.f32.mrf.mxu0
        %v799 = vadd.f32 0.0, %v798
        %v800 = vpop.f32.mrf.mxu0
        %v801 = vadd.f32 0.0, %v800
        %802 = vmatmul.bf16.gmra.mxu0 %v781
        %v803 = vpop.f32.mrf.mxu0
        %v804 = vadd.f32 0.0, %v803
        %v805 = vpop.f32.mrf.mxu0
        %v806 = vadd.f32 0.0, %v805
        %807 = vmatmul.bf16.gmra.mxu0 %v784
        %v808 = vpop.f32.mrf.mxu0
        %v809 = vadd.f32 0.0, %v808
        %v810 = vpop.f32.mrf.mxu0
        %v811 = vadd.f32 0.0, %v810
        %812 = vmatmul.bf16.gmra.mxu0 %v787
        %v813 = vpop.f32.mrf.mxu0
        %v814 = vadd.f32 0.0, %v813
        %v815 = vpop.f32.mrf.mxu0
        %v816 = vadd.f32 0.0, %v815
        %817 = vdwg.mxu0
        %v818 = vsub.f32 %v752, %v799
        %v819 = vsub.f32 %v754, %v801
        %v820 = vsub.f32 %v757, %v804
        %v821 = vsub.f32 %v759, %v806
        %v822 = vsub.f32 %v762, %v809
        %v823 = vsub.f32 %v764, %v811
        %v824 = vsub.f32 %v767, %v814
        %v825 = vsub.f32 %v769, %v816
        %826 = vmatpush.bf16.msra.mxu0 0
        %827 = vmatpush.bf16.msra.mxu0 0
        %828 = vmatpush.bf16.msra.mxu0 0
        %829 = vmatpush.bf16.msra.mxu0 0
        %830 = vmatpush.bf16.msra.mxu0 0
        %831 = vmatpush.bf16.msra.mxu0 0
        %832 = vmatpush.bf16.msra.mxu0 0
        %833 = vmatpush.bf16.msra.mxu0 %v775
        %834 = vmatmul.bf16.gmra.mxu0 %v731
        %v835 = vpop.f32.mrf.mxu0
        %v836 = vadd.f32 0.0, %v835
        %v837 = vpop.f32.mrf.mxu0
        %v838 = vadd.f32 0.0, %v837
        %839 = vmatmul.bf16.gmra.mxu0 %v734
        %v840 = vpop.f32.mrf.mxu0
        %v841 = vadd.f32 0.0, %v840
        %v842 = vpop.f32.mrf.mxu0
        %v843 = vadd.f32 0.0, %v842
        %844 = vmatmul.bf16.gmra.mxu0 %v737
        %v845 = vpop.f32.mrf.mxu0
        %v846 = vadd.f32 0.0, %v845
        %v847 = vpop.f32.mrf.mxu0
        %v848 = vadd.f32 0.0, %v847
        %849 = vmatmul.bf16.gmra.mxu0 %v740
        %v850 = vpop.f32.mrf.mxu0
        %v851 = vadd.f32 0.0, %v850
        %v852 = vpop.f32.mrf.mxu0
        %v853 = vadd.f32 0.0, %v852
        %854 = vdwg.mxu0
        %855 = vmatpush.bf16.msra.mxu0 0
        %856 = vmatpush.bf16.msra.mxu0 0
        %857 = vmatpush.bf16.msra.mxu0 0
        %858 = vmatpush.bf16.msra.mxu0 0
        %859 = vmatpush.bf16.msra.mxu0 0
        %860 = vmatpush.bf16.msra.mxu0 0
        %861 = vmatpush.bf16.msra.mxu0 0
        %862 = vmatpush.bf16.msra.mxu0 %v728
        %863 = vmatmul.bf16.gmra.mxu0 %v778
        %v864 = vpop.f32.mrf.mxu0
        %v865 = vadd.f32 %v836, %v864
        %v866 = vpop.f32.mrf.mxu0
        %v867 = vadd.f32 %v838, %v866
        %868 = vmatmul.bf16.gmra.mxu0 %v781
        %v869 = vpop.f32.mrf.mxu0
        %v870 = vadd.f32 %v841, %v869
        %v871 = vpop.f32.mrf.mxu0
        %v872 = vadd.f32 %v843, %v871
        %873 = vmatmul.bf16.gmra.mxu0 %v784
        %v874 = vpop.f32.mrf.mxu0
        %v875 = vadd.f32 %v846, %v874
        %v876 = vpop.f32.mrf.mxu0
        %v877 = vadd.f32 %v848, %v876
        %878 = vmatmul.bf16.gmra.mxu0 %v787
        %v879 = vpop.f32.mrf.mxu0
        %v880 = vadd.f32 %v851, %v879
        %v881 = vpop.f32.mrf.mxu0
        %v882 = vadd.f32 %v853, %v881
        %883 = vdwg.mxu0
        %v884 = vmul.f32 %v818, %v818
        %v885 = vmul.f32 %v819, %v819
        %v886 = vmul.f32 %v820, %v820
        %v887 = vmul.f32 %v821, %v821
        %v888 = vmul.f32 %v822, %v822
        %v889 = vmul.f32 %v823, %v823
        %v890 = vmul.f32 %v824, %v824
        %v891 = vmul.f32 %v825, %v825
        %v892 = vmul.f32 %v865, %v865
        %v893 = vmul.f32 %v867, %v867
        %v894 = vmul.f32 %v870, %v870
        %v895 = vmul.f32 %v872, %v872
        %v896 = vmul.f32 %v875, %v875
        %v897 = vmul.f32 %v877, %v877
        %v898 = vmul.f32 %v880, %v880
        %v899 = vmul.f32 %v882, %v882
        %v900 = vadd.f32 %v884, %v892
        %v901 = vadd.f32 %v885, %v893
        %v902 = vadd.f32 %v886, %v894
        %v903 = vadd.f32 %v887, %v895
        %v904 = vadd.f32 %v888, %v896
        %v905 = vadd.f32 %v889, %v897
        %v906 = vadd.f32 %v890, %v898
        %v907 = vadd.f32 %v891, %v899
        %v908 = vrsqrt.pop %v900
        %v909 = vmul.f32 %v908, %v900
        %v910 = vmul.f32 %v909, %v908
        %v911 = vmul.f32 0.5, %v910
        %v912 = vsub.f32 1.5, %v911
        %v913 = vmul.f32 %v908, %v912
        %v914 = vmul.f32 %v900, %v913
        %vm915 = vcmp.eq.f32.partialorder %v900, inf
        %v916 = vsel %vm915, %v900, %v914
        %vm917 = vcmp.eq.f32.partialorder %v900, 0.0
        %v918 = vand.u32 %v900, 2147483648
        %v919 = vsel %vm917, %v918, %v916
        %v920 = vrsqrt.pop %v901
        %v921 = vmul.f32 %v920, %v901
        %v922 = vmul.f32 %v921, %v920
        %v923 = vmul.f32 0.5, %v922
        %v924 = vsub.f32 1.5, %v923
        %v925 = vmul.f32 %v920, %v924
        %v926 = vmul.f32 %v901, %v925
        %vm927 = vcmp.eq.f32.partialorder %v901, inf
        %v928 = vsel %vm927, %v901, %v926
        %vm929 = vcmp.eq.f32.partialorder %v901, 0.0
        %v930 = vand.u32 %v901, 2147483648
        %v931 = vsel %vm929, %v930, %v928
        %v932 = vrsqrt.pop %v902
        %v933 = vmul.f32 %v932, %v902
        %v934 = vmul.f32 %v933, %v932
        %v935 = vmul.f32 0.5, %v934
        %v936 = vsub.f32 1.5, %v935
        %v937 = vmul.f32 %v932, %v936
        %v938 = vmul.f32 %v902, %v937
        %vm939 = vcmp.eq.f32.partialorder %v902, inf
        %v940 = vsel %vm939, %v902, %v938
        %vm941 = vcmp.eq.f32.partialorder %v902, 0.0
        %v942 = vand.u32 %v902, 2147483648
        %v943 = vsel %vm941, %v942, %v940
        %v944 = vrsqrt.pop %v903
        %v945 = vmul.f32 %v944, %v903
        %v946 = vmul.f32 %v945, %v944
        %v947 = vmul.f32 0.5, %v946
        %v948 = vsub.f32 1.5, %v947
        %v949 = vmul.f32 %v944, %v948
        %v950 = vmul.f32 %v903, %v949
        %vm951 = vcmp.eq.f32.partialorder %v903, inf
        %v952 = vsel %vm951, %v903, %v950
        %vm953 = vcmp.eq.f32.partialorder %v903, 0.0
        %v954 = vand.u32 %v903, 2147483648
        %v955 = vsel %vm953, %v954, %v952
        %v956 = vrsqrt.pop %v904
        %v957 = vmul.f32 %v956, %v904
        %v958 = vmul.f32 %v957, %v956
        %v959 = vmul.f32 0.5, %v958
        %v960 = vsub.f32 1.5, %v959
        %v961 = vmul.f32 %v956, %v960
        %v962 = vmul.f32 %v904, %v961
        %vm963 = vcmp.eq.f32.partialorder %v904, inf
        %v964 = vsel %vm963, %v904, %v962
        %vm965 = vcmp.eq.f32.partialorder %v904, 0.0
        %v966 = vand.u32 %v904, 2147483648
        %v967 = vsel %vm965, %v966, %v964
        %v968 = vrsqrt.pop %v905
        %v969 = vmul.f32 %v968, %v905
        %v970 = vmul.f32 %v969, %v968
        %v971 = vmul.f32 0.5, %v970
        %v972 = vsub.f32 1.5, %v971
        %v973 = vmul.f32 %v968, %v972
        %v974 = vmul.f32 %v905, %v973
        %vm975 = vcmp.eq.f32.partialorder %v905, inf
        %v976 = vsel %vm975, %v905, %v974
        %vm977 = vcmp.eq.f32.partialorder %v905, 0.0
        %v978 = vand.u32 %v905, 2147483648
        %v979 = vsel %vm977, %v978, %v976
        %v980 = vrsqrt.pop %v906
        %v981 = vmul.f32 %v980, %v906
        %v982 = vmul.f32 %v981, %v980
        %v983 = vmul.f32 0.5, %v982
        %v984 = vsub.f32 1.5, %v983
        %v985 = vmul.f32 %v980, %v984
        %v986 = vmul.f32 %v906, %v985
        %vm987 = vcmp.eq.f32.partialorder %v906, inf
        %v988 = vsel %vm987, %v906, %v986
        %vm989 = vcmp.eq.f32.partialorder %v906, 0.0
        %v990 = vand.u32 %v906, 2147483648
        %v991 = vsel %vm989, %v990, %v988
        %v992 = vrsqrt.pop %v907
        %v993 = vmul.f32 %v992, %v907
        %v994 = vmul.f32 %v993, %v992
        %v995 = vmul.f32 0.5, %v994
        %v996 = vsub.f32 1.5, %v995
        %v997 = vmul.f32 %v992, %v996
        %v998 = vmul.f32 %v907, %v997
        %vm999 = vcmp.eq.f32.partialorder %v907, inf
        %v1000 = vsel %vm999, %v907, %v998
        %vm1001 = vcmp.eq.f32.partialorder %v907, 0.0
        %v1002 = vand.u32 %v907, 2147483648
        %v1003 = vsel %vm1001, %v1002, %v1000
        %v1004 = vsel %vm377, %v919, 0.0
        %v1005 = vsel %vm377, %v931, 0.0
        %v1006 = vadd.f32 %v1004, %v1005
        %v1007 = vsel %vm377, %v943, 0.0
        %v1008 = vadd.f32 %v1006, %v1007
        %v1009 = vsel %vm377, %v955, 0.0
        %v1010 = vadd.f32 %v1008, %v1009
        %v1011 = vsel %vm377, %v967, 0.0
        %v1012 = vadd.f32 %v1010, %v1011
        %v1013 = vsel %vm377, %v979, 0.0
        %v1014 = vadd.f32 %v1012, %v1013
        %v1015 = vsel %vm377, %v991, 0.0
        %v1016 = vadd.f32 %v1014, %v1015
        %v1017 = vsel %vm377, %v1003, 0.0
        %v1018 = vadd.f32 %v1016, %v1017
        %1019 = vadd.xlane.f32.xlu0 %v1018
        %v1020 = vpop.xlane.xlu0 %1019
        %v1021 = vrot.slane %v1020, 4
        %v1022 = vadd.f32 %v1020, %v1021
        %v1023 = vrot.slane %v1022, 2
        %v1024 = vadd.f32 %v1022, %v1023
        %v1025 = vrot.slane %v1024, 1
        %v1026 = vadd.f32 %v1024, %v1025
        %s1027 = vtos %v1026
        %v1028 = vstv %s1027
        %vm1029 = vcmask 0
        %1030 = vst.msk [vmem:[%s315] sm:$0x1] %vm1029, %v1028
        %p1031 = scmp.lt.s32.totalorder %s23, 1
        %s1032 = scalar_select %p1031, %s23, 1
        %s1033 = scalar_lea.vmem %s6, %s1032
        // Predicated region
        $region53: #{fft_loss.1} parent=43 // pred_check
          %p1034 = pneg %p177
        $region54: #{fft_loss.1} parent=43 // pred_check_branch
          %1036 = sbr.rel (%p1034) target = $region56
        $region55: #{fft_loss.1} parent=43 // pred_region
          _
        $region56: #{fft_loss.1} parent=43 // pred_fallthru
          _
      $region44: #{fft_loss.1} parent=5 // pred_fallthru
        _
      %p1037 = scmp.le.s32.totalorder 2, %s18
      // Predicated region
      $region57: #{fft_loss.1} parent=5 // pred_check
        %p1038 = pneg %p1037
      $region58: #{fft_loss.1} parent=5 // pred_check_branch
        %1040 = sbr.rel (%p1038) target = $region60
      $region59: #{fft_loss.1} parent=5 // pred_region
        %s1041 = ssub.s32 %s18, 2
        // Predicated region
        $region61: #{fft_loss.1} parent=59 // pred_check
          %p1042 = pneg %p183
        $region62: #{fft_loss.1} parent=59 // pred_check_branch
          %1044 = sbr.rel (%p1042) target = $region64
        $region63: #{fft_loss.1} parent=59 // pred_region
          %p1045 = scmp.lt.s32.totalorder %s24, 1
          %s1046 = scalar_select %p1045, %s24, 1
          %s1047 = scalar_lea.vmem %s6, %s1046
        $region64: #{fft_loss.1} parent=59 // pred_fallthru
          _
      $region60: #{fft_loss.1} parent=5 // pred_fallthru
        _
    $region6: #{fft_loss.1} parent=1 // loop_footer
      %s22 = sadd.s32 1, %s18
    $region7: #{fft_loss.1} parent=1 // loop_footer_branch
      %17 = sbr.rel target = $region3
    $region8: #{fft_loss.1} parent=1 // loop_exit
      _
    %1048 = vsyncpa [#allocation3], 1
    %s1049 = scalar_lea.sflag [#allocation3], 1
    %1050 = vsyncpa %s1049, 1
    %1051 = vsyncpa [#allocation5], 1
    %s1052 = scalar_lea.sflag [#allocation5], 1
    %1053 = vsyncpa %s1052, 1

</llo_original>
